<compile_context>
chip_gen: v5e
topology: v5e:2x2
jax: 0.10.0
libtpu: 0.0.40
codegen_flags: <defaults>
</compile_context>

<pallas_src>
import functools

import jax
import jax.numpy as jnp
from jax.experimental import pallas as pl
from jax.experimental.pallas import tpu as pltpu

RRELU_SLOPE = (1.0 / 8.0 + 1.0 / 3.0) / 2.0  # = 11/48, F.rrelu eval slope
BN_EPS = 1e-5
LANE = 128                 # lane-dense padded width for the final (2-class) layer
VMEM_BUDGET = 40 << 20     # per-tile budget; leaves headroom inside v7x's 64 MiB


def _rrelu(x):
    # deterministic rrelu (eval mode): leaky relu with mean slope
    return jnp.where(x >= 0, x, RRELU_SLOPE * x)


def _round_up(n, m):
    return ((n + m - 1) // m) * m


# ----------------------------------------------------------------------------
# Kernel: 5 matmuls (bf16 x bf16 -> f32 acc) + bias + leaky-relu, BN pre-folded.
# x arrives f32 and is cast to bf16 in-kernel; logits stored as bf16.
# ----------------------------------------------------------------------------
def net_tune_kernel(
    x_ref,
    w0_ref, b0_ref,
    w1_ref, b1_ref,
    w2_ref, b2_ref,
    w3_ref, b3_ref,
    w4_ref, b4_ref,
    o_ref,
):
    def layer(h_bf16, w_ref, b_ref):
        # bf16 operands, f32 accumulation on the MXU; bias add in f32.
        return (
            jnp.dot(h_bf16, w_ref[...], preferred_element_type=jnp.float32)
            + b_ref[...]
        )

    h = x_ref[...].astype(jnp.bfloat16)                          # fused cast
    h = _rrelu(layer(h, w0_ref, b0_ref)).astype(jnp.bfloat16)
    h = _rrelu(layer(h, w1_ref, b1_ref)).astype(jnp.bfloat16)    # BN1 folded
    h = _rrelu(layer(h, w2_ref, b2_ref)).astype(jnp.bfloat16)    # BN2 folded
    h = _rrelu(layer(h, w3_ref, b3_ref)).astype(jnp.bfloat16)    # BN3 folded
    # final layer: lane-dense padded logits, bf16 store (halves writeback)
    o_ref[...] = layer(h, w4_ref, b4_ref).astype(o_ref.dtype)


# ----------------------------------------------------------------------------
# Wrapper: batch-tiled grid, weights pinned resident, lane-padded bf16 output.
# ----------------------------------------------------------------------------
@functools.partial(jax.jit, static_argnames=("n_classes", "tile_b"))
def net_tune_forward(x, kparams, *, n_classes=2, tile_b=4096):
    """x: [B, input_size] f32.  kparams: output of fold_and_pack_params."""
    batch, in_dim = x.shape
    n_pad = kparams[-1].shape[-1]                 # lane-padded output width (= LANE)
    layer_widths = [p.shape[-1] for p in kparams[0::2]]
    w_bytes = sum(int(p.size) * p.dtype.itemsize for p in kparams)

    def vmem_need(tb):
        # double-buffered x (f32) and out (bf16), resident weights (x2 to be
        # conservative), plus live f32 pre-activation + bf16 activation temps
        # at the widest layer (x2 margin for compiler temporaries).
        return (2 * tb * in_dim * 4
                + 2 * tb * n_pad * 2
                + tb * max(layer_widths) * 6 * 2
                + 2 * w_bytes)

    # 16-row granularity (bf16 packs 16 rows per sublane tile); clamp to batch.
    tile_b = int(min(tile_b, _round_up(batch, 16)))
    tile_b = max(16, (tile_b // 16) * 16)
    while vmem_need(tile_b) > VMEM_BUDGET and tile_b > 128:
        tile_b = max(128, tile_b // 2)
    # v7x: keep >=2 grid steps for decent-sized batches so the "parallel" axis
    # can shard across both TensorCores.
    if batch >= 2048 and pl.cdiv(batch, tile_b) < 2:
        tile_b = _round_up(pl.cdiv(batch, 2), 16)
    if tile_b >= batch:
        tile_b = batch                     # single full-extent block, always legal
    grid_b = pl.cdiv(batch, tile_b)

    vmem_limit = int(min(48 << 20, max(32 << 20, vmem_need(tile_b) + (4 << 20))))

    # x/out tiled along batch (ragged last block handled by Pallas edge
    # padding/masked writeback); weights & biases are full blocks with a
    # constant index_map so they stay VMEM-resident across all grid steps.
    in_specs = [pl.BlockSpec((tile_b, in_dim), lambda i: (i, 0))]
    in_specs += [pl.BlockSpec(p.shape, lambda i: (0, 0)) for p in kparams]
    out_spec = pl.BlockSpec((tile_b, n_pad), lambda i: (i, 0))

    # advisory cost estimate (weights are [in, out] -> flops = 2*B*in*out)
    flops = 2 * batch * sum(
        int(kparams[j].shape[0]) * int(kparams[j].shape[1]) for j in (0, 2, 4, 6, 8)
    )
    bytes_accessed = (
        batch * in_dim * 4            # f32 input
        + w_bytes                     # resident weights/biases
        + batch * n_pad * 2           # bf16 output
    )

    out_pad = pl.pallas_call(
        net_tune_kernel,
        out_shape=jax.ShapeDtypeStruct((batch, n_pad), jnp.bfloat16),
        grid=(grid_b,),
        in_specs=in_specs,
        out_specs=out_spec,
        compiler_params=pltpu.CompilerParams(
            dimension_semantics=("parallel",),
            vmem_limit_bytes=vmem_limit,
        ),
        cost_estimate=pl.CostEstimate(
            flops=flops, transcendentals=0, bytes_accessed=bytes_accessed
        ),
    )(x, *kparams)

    return out_pad[:, :n_classes]


# ----------------------------------------------------------------------------
# Parameter prep: fold eval-mode BN into adjacent Linear, cast weights to
# bf16, pad the final layer to a lane-dense width.
# ----------------------------------------------------------------------------
def fold_and_pack_params(raw_params, n_pad=LANE):
    (w0, b0,
     w1, b1, g1, be1, m1, v1,
     w2, b2, g2, be2, m2, v2,
     w3, b3, g3, be3, m3, v3,
     w4, b4) = raw_params

    def fold(w, b, gamma, beta, mean, var):
        # BN(x W + b) == x (W*s) + ((b - mean)*s + beta),  s = gamma*rsqrt(var+eps)
        s = gamma * jax.lax.rsqrt(var + BN_EPS)          # (1, out)
        return w * s, (b - mean) * s + beta

    w1f, b1f = fold(w1, b1, g1, be1, m1, v1)
    w2f, b2f = fold(w2, b2, g2, be2, m2, v2)
    w3f, b3f = fold(w3, b3, g3, be3, m3, v3)

    # lane-dense final layer: zero-pad out-features (2 -> n_pad)
    n_classes = w4.shape[1]
    w4p = jnp.pad(w4, ((0, 0), (0, n_pad - n_classes)))
    b4p = jnp.pad(b4, ((0, 0), (0, n_pad - n_classes)))

    bf = lambda w: w.astype(jnp.bfloat16)
    return (
        bf(w0), b0,
        bf(w1f), b1f,
        bf(w2f), b2f,
        bf(w3f), b3f,
        bf(w4p), b4p,
    )


# ----------------------------------------------------------------------------
# Deterministic synthetic parameters (PyTorch-Linear-like scaling).
# ----------------------------------------------------------------------------
def init_params(key, input_size, h1, h2, n_classes=2):
    keys = jax.random.split(key, 16)
    ki = iter(range(16))

    def linear(k_w, k_b, fan_in, fan_out):
        bound = 1.0 / jnp.sqrt(jnp.float32(fan_in))
        # stored pre-transposed: [in, out]
        w = jax.random.uniform(k_w, (fan_in, fan_out), jnp.float32, -bound, bound)
        b = jax.random.uniform(k_b, (1, fan_out), jnp.float32, -bound, bound)
        return w, b

    def bn(k_m, k_v, n):
        gamma = jnp.ones((1, n), jnp.float32)
        beta = jnp.zeros((1, n), jnp.float32)
        mean = 0.1 * jax.random.normal(k_m, (1, n), jnp.float32)
        var = 1.0 + 0.05 * jax.random.uniform(k_v, (1, n), jnp.float32)
        return gamma, beta, mean, var

    w0, b0 = linear(keys[next(ki)], keys[next(ki)], input_size, h1)
    w1, b1 = linear(keys[next(ki)], keys[next(ki)], h1, h2)
    g1, be1, m1, v1 = bn(keys[next(ki)], keys[next(ki)], h2)
    w2, b2 = linear(keys[next(ki)], keys[next(ki)], h2, h2)
    g2, be2, m2, v2 = bn(keys[next(ki)], keys[next(ki)], h2)
    w3, b3 = linear(keys[next(ki)], keys[next(ki)], h2, h1)
    g3, be3, m3, v3 = bn(keys[next(ki)], keys[next(ki)], h1)
    w4, b4 = linear(keys[next(ki)], keys[next(ki)], h1, n_classes)

    return (
        w0, b0,
        w1, b1, g1, be1, m1, v1,
        w2, b2, g2, be2, m2, v2,
        w3, b3, g3, be3, m3, v3,
        w4, b4,
    )


# ----------------------------------------------------------------------------
# References.
# ----------------------------------------------------------------------------
def reference_forward_packed(x, kparams, n_classes=2):
    """Same numerics as the kernel (folded BN, bf16 operands, bf16 logits)."""
    (w0, b0, w1, b1, w2, b2, w3, b3, w4, b4) = kparams

    def layer(h_bf16, w, b):
        return jnp.dot(h_bf16, w, preferred_element_type=jnp.float32) + b

    h = x.astype(jnp.bfloat16)
    h = _rrelu(layer(h, w0, b0)).astype(jnp.bfloat16)
    h = _rrelu(layer(h, w1, b1)).astype(jnp.bfloat16)
    h = _rrelu(layer(h, w2, b2)).astype(jnp.bfloat16)
    h = _rrelu(layer(h, w3, b3)).astype(jnp.bfloat16)
    out = layer(h, w4, b4).astype(jnp.bfloat16)
    return out[:, :n_classes].astype(jnp.float32)


def reference_forward_f32(x, raw_params):
    """Full-precision, un-folded reference (original module math)."""
    (w0, b0,
     w1, b1, g1, be1, m1, v1,
     w2, b2, g2, be2, m2, v2,
     w3, b3, g3, be3, m3, v3,
     w4, b4) = raw_params

    def bn(h, gamma, beta, mean, var):
        return (h - mean) * jax.lax.rsqrt(var + BN_EPS) * gamma + beta

    h = _rrelu(x @ w0 + b0)
    h = _rrelu(bn(h @ w1 + b1, g1, be1, m1, v1))
    h = _rrelu(bn(h @ w2 + b2, g2, be2, m2, v2))
    h = _rrelu(bn(h @ w3 + b3, g3, be3, m3, v3))
    return h @ w4 + b4


if __name__ == "__main__":
    # small shapes consistent with the module (input_size, hidden_1, hidden_2)
    batch, input_size, h1, h2 = 50, 256, 128, 256

    key = jax.random.PRNGKey(0)
    k_x, k_p = jax.random.split(key)
    x = jax.random.normal(k_x, (batch, input_size), jnp.float32)

    raw_params = init_params(k_p, input_size, h1, h2)
    kparams = fold_and_pack_params(raw_params)

    # exact-math reference (same bf16/folded numerics as the kernel)
    ref = reference_forward_packed(x, kparams)
    # full-precision original-module reference
    ref32 = reference_forward_f32(x, raw_params)

    # 1) default tile (single full-extent block for this small batch)
    out = jax.block_until_ready(net_tune_forward(x, kparams))
    assert out.shape == (batch, 2), out.shape
    out_f32 = out.astype(jnp.float32)
    assert jnp.allclose(out_f32, ref, atol=3e-2, rtol=3e-2), (
        float(jnp.max(jnp.abs(out_f32 - ref)))
    )
    assert jnp.allclose(out_f32, ref32, atol=2e-1, rtol=1e-1), (
        float(jnp.max(jnp.abs(out_f32 - ref32)))
    )

    # 2) explicitly tiled path with a ragged last block (exercises Pallas
    #    edge-block padding / masked writeback with no wrapper-side jnp.pad)
    out_t = jax.block_until_ready(net_tune_forward(x, kparams, tile_b=32))
    out_t_f32 = out_t.astype(jnp.float32)
    assert out_t.shape == (batch, 2), out_t.shape
    assert jnp.allclose(out_t_f32, ref, atol=3e-2, rtol=3e-2), (
        float(jnp.max(jnp.abs(out_t_f32 - ref)))
    )

    print("KERNEL_OK")
</pallas_src>

<mosaic_0001>
module attributes {stable_mosaic.version = 11 : i64} {
  func.func @net_tune_kernel(%arg0: i32, %arg1: memref<50x256xf32, #tpu.memory_space<vmem>>, %arg2: memref<256x128xbf16, #tpu.memory_space<vmem>>, %arg3: memref<1x128xf32, #tpu.memory_space<vmem>>, %arg4: memref<128x256xbf16, #tpu.memory_space<vmem>>, %arg5: memref<1x256xf32, #tpu.memory_space<vmem>>, %arg6: memref<256x256xbf16, #tpu.memory_space<vmem>>, %arg7: memref<1x256xf32, #tpu.memory_space<vmem>>, %arg8: memref<256x128xbf16, #tpu.memory_space<vmem>>, %arg9: memref<1x128xf32, #tpu.memory_space<vmem>>, %arg10: memref<128x128xbf16, #tpu.memory_space<vmem>>, %arg11: memref<1x128xf32, #tpu.memory_space<vmem>>, %arg12: memref<50x128xbf16, #tpu.memory_space<vmem>>) attributes {dimension_semantics = [#tpu.dimension_semantics<parallel>], iteration_bounds = array<i64: 1>, scalar_prefetch = 0 : i64, scratch_operands = 0 : i64, tpu.core_type = #tpu.core_type<tc>, window_params = [{transform_indices = @transform_0, window_bounds = array<i64: 50, 256>}, {pipeline_mode = #tpu.pipeline_mode<synchronous>, transform_indices = @transform_1, window_bounds = array<i64: 256, 128>}, {pipeline_mode = #tpu.pipeline_mode<synchronous>, transform_indices = @transform_2, window_bounds = array<i64: 1, 128>}, {pipeline_mode = #tpu.pipeline_mode<synchronous>, transform_indices = @transform_3, window_bounds = array<i64: 128, 256>}, {pipeline_mode = #tpu.pipeline_mode<synchronous>, transform_indices = @transform_4, window_bounds = array<i64: 1, 256>}, {pipeline_mode = #tpu.pipeline_mode<synchronous>, transform_indices = @transform_5, window_bounds = array<i64: 256, 256>}, {pipeline_mode = #tpu.pipeline_mode<synchronous>, transform_indices = @transform_6, window_bounds = array<i64: 1, 256>}, {pipeline_mode = #tpu.pipeline_mode<synchronous>, transform_indices = @transform_7, window_bounds = array<i64: 256, 128>}, {pipeline_mode = #tpu.pipeline_mode<synchronous>, transform_indices = @transform_8, window_bounds = array<i64: 1, 128>}, {pipeline_mode = #tpu.pipeline_mode<synchronous>, transform_indices = @transform_9, window_bounds = array<i64: 128, 128>}, {pipeline_mode = #tpu.pipeline_mode<synchronous>, transform_indices = @transform_10, window_bounds = array<i64: 1, 128>}, {transform_indices = @transform_11, window_bounds = array<i64: 50, 128>}]} {
    %c0 = arith.constant 0 : index
    %c0_0 = arith.constant 0 : index
    %0 = vector.load %arg1[%c0, %c0_0] : memref<50x256xf32, #tpu.memory_space<vmem>>, vector<50x256xf32>
    %1 = arith.truncf %0 : vector<50x256xf32> to vector<50x256xbf16>
    %c0_1 = arith.constant 0 : index
    %c0_2 = arith.constant 0 : index
    %2 = vector.load %arg2[%c0_1, %c0_2] : memref<256x128xbf16, #tpu.memory_space<vmem>>, vector<256x128xbf16>
    %cst = arith.constant dense<0.000000e+00> : vector<50x128xf32>
    %3 = tpu.matmul %1, %2, %cst {dimension_numbers = #tpu.dot_dimension_numbers<[1], [0], [0], [1], [0, 0, 1, 1], [], []>} : vector<50x256xbf16>, vector<256x128xbf16>, vector<50x128xf32> -> vector<50x128xf32>
    %c0_3 = arith.constant 0 : index
    %c0_4 = arith.constant 0 : index
    %4 = vector.load %arg3[%c0_3, %c0_4] : memref<1x128xf32, #tpu.memory_space<vmem>>, vector<1x128xf32>
    %5 = vector.broadcast %4 : vector<1x128xf32> to vector<50x128xf32>
    %6 = arith.addf %3, %5 : vector<50x128xf32>
    %cst_5 = arith.constant 0.000000e+00 : f32
    %7 = vector.broadcast %cst_5 : f32 to vector<50x128xf32>
    %8 = arith.cmpf oge, %6, %7 : vector<50x128xf32>
    %cst_6 = arith.constant 0.229166672 : f32
    %9 = vector.broadcast %cst_6 : f32 to vector<50x128xf32>
    %10 = arith.mulf %9, %6 : vector<50x128xf32>
    %11 = arith.select %8, %6, %10 : vector<50x128xi1>, vector<50x128xf32>
    %12 = arith.truncf %11 : vector<50x128xf32> to vector<50x128xbf16>
    %c0_7 = arith.constant 0 : index
    %c0_8 = arith.constant 0 : index
    %13 = vector.load %arg4[%c0_7, %c0_8] : memref<128x256xbf16, #tpu.memory_space<vmem>>, vector<128x256xbf16>
    %cst_9 = arith.constant dense<0.000000e+00> : vector<50x256xf32>
    %14 = tpu.matmul %12, %13, %cst_9 {dimension_numbers = #tpu.dot_dimension_numbers<[1], [0], [0], [1], [0, 0, 1, 1], [], []>} : vector<50x128xbf16>, vector<128x256xbf16>, vector<50x256xf32> -> vector<50x256xf32>
    %c0_10 = arith.constant 0 : index
    %c0_11 = arith.constant 0 : index
    %15 = vector.load %arg5[%c0_10, %c0_11] : memref<1x256xf32, #tpu.memory_space<vmem>>, vector<1x256xf32>
    %16 = vector.broadcast %15 : vector<1x256xf32> to vector<50x256xf32>
    %17 = arith.addf %14, %16 : vector<50x256xf32>
    %cst_12 = arith.constant 0.000000e+00 : f32
    %18 = vector.broadcast %cst_12 : f32 to vector<50x256xf32>
    %19 = arith.cmpf oge, %17, %18 : vector<50x256xf32>
    %cst_13 = arith.constant 0.229166672 : f32
    %20 = vector.broadcast %cst_13 : f32 to vector<50x256xf32>
    %21 = arith.mulf %20, %17 : vector<50x256xf32>
    %22 = arith.select %19, %17, %21 : vector<50x256xi1>, vector<50x256xf32>
    %23 = arith.truncf %22 : vector<50x256xf32> to vector<50x256xbf16>
    %c0_14 = arith.constant 0 : index
    %c0_15 = arith.constant 0 : index
    %24 = vector.load %arg6[%c0_14, %c0_15] : memref<256x256xbf16, #tpu.memory_space<vmem>>, vector<256x256xbf16>
    %cst_16 = arith.constant dense<0.000000e+00> : vector<50x256xf32>
    %25 = tpu.matmul %23, %24, %cst_16 {dimension_numbers = #tpu.dot_dimension_numbers<[1], [0], [0], [1], [0, 0, 1, 1], [], []>} : vector<50x256xbf16>, vector<256x256xbf16>, vector<50x256xf32> -> vector<50x256xf32>
    %c0_17 = arith.constant 0 : index
    %c0_18 = arith.constant 0 : index
    %26 = vector.load %arg7[%c0_17, %c0_18] : memref<1x256xf32, #tpu.memory_space<vmem>>, vector<1x256xf32>
    %27 = vector.broadcast %26 : vector<1x256xf32> to vector<50x256xf32>
    %28 = arith.addf %25, %27 : vector<50x256xf32>
    %cst_19 = arith.constant 0.000000e+00 : f32
    %29 = vector.broadcast %cst_19 : f32 to vector<50x256xf32>
    %30 = arith.cmpf oge, %28, %29 : vector<50x256xf32>
    %cst_20 = arith.constant 0.229166672 : f32
    %31 = vector.broadcast %cst_20 : f32 to vector<50x256xf32>
    %32 = arith.mulf %31, %28 : vector<50x256xf32>
    %33 = arith.select %30, %28, %32 : vector<50x256xi1>, vector<50x256xf32>
    %34 = arith.truncf %33 : vector<50x256xf32> to vector<50x256xbf16>
    %c0_21 = arith.constant 0 : index
    %c0_22 = arith.constant 0 : index
    %35 = vector.load %arg8[%c0_21, %c0_22] : memref<256x128xbf16, #tpu.memory_space<vmem>>, vector<256x128xbf16>
    %cst_23 = arith.constant dense<0.000000e+00> : vector<50x128xf32>
    %36 = tpu.matmul %34, %35, %cst_23 {dimension_numbers = #tpu.dot_dimension_numbers<[1], [0], [0], [1], [0, 0, 1, 1], [], []>} : vector<50x256xbf16>, vector<256x128xbf16>, vector<50x128xf32> -> vector<50x128xf32>
    %c0_24 = arith.constant 0 : index
    %c0_25 = arith.constant 0 : index
    %37 = vector.load %arg9[%c0_24, %c0_25] : memref<1x128xf32, #tpu.memory_space<vmem>>, vector<1x128xf32>
    %38 = vector.broadcast %37 : vector<1x128xf32> to vector<50x128xf32>
    %39 = arith.addf %36, %38 : vector<50x128xf32>
    %cst_26 = arith.constant 0.000000e+00 : f32
    %40 = vector.broadcast %cst_26 : f32 to vector<50x128xf32>
    %41 = arith.cmpf oge, %39, %40 : vector<50x128xf32>
    %cst_27 = arith.constant 0.229166672 : f32
    %42 = vector.broadcast %cst_27 : f32 to vector<50x128xf32>
    %43 = arith.mulf %42, %39 : vector<50x128xf32>
    %44 = arith.select %41, %39, %43 : vector<50x128xi1>, vector<50x128xf32>
    %45 = arith.truncf %44 : vector<50x128xf32> to vector<50x128xbf16>
    %c0_28 = arith.constant 0 : index
    %c0_29 = arith.constant 0 : index
    %46 = vector.load %arg10[%c0_28, %c0_29] : memref<128x128xbf16, #tpu.memory_space<vmem>>, vector<128x128xbf16>
    %cst_30 = arith.constant dense<0.000000e+00> : vector<50x128xf32>
    %47 = tpu.matmul %45, %46, %cst_30 {dimension_numbers = #tpu.dot_dimension_numbers<[1], [0], [0], [1], [0, 0, 1, 1], [], []>} : vector<50x128xbf16>, vector<128x128xbf16>, vector<50x128xf32> -> vector<50x128xf32>
    %c0_31 = arith.constant 0 : index
    %c0_32 = arith.constant 0 : index
    %48 = vector.load %arg11[%c0_31, %c0_32] : memref<1x128xf32, #tpu.memory_space<vmem>>, vector<1x128xf32>
    %49 = vector.broadcast %48 : vector<1x128xf32> to vector<50x128xf32>
    %50 = arith.addf %47, %49 : vector<50x128xf32>
    %51 = arith.truncf %50 : vector<50x128xf32> to vector<50x128xbf16>
    %c0_33 = arith.constant 0 : index
    %c0_34 = arith.constant 0 : index
    %52 = vector.load %arg12[%c0_33, %c0_34] : memref<50x128xbf16, #tpu.memory_space<vmem>>, vector<50x128xbf16>
    tpu.vector_store %arg12[%c0_33, %c0_34], %51 {strides = array<i32>} : memref<50x128xbf16, #tpu.memory_space<vmem>>, vector<50x128xbf16>,
    return
  }
  func.func @transform_0(%arg0: i32) -> (i32, i32) {
    %c0_i32 = arith.constant 0 : i32
    %c0_i32_0 = arith.constant 0 : i32
    return %arg0, %c0_i32 : i32, i32
  }
  func.func @transform_1(%arg0: i32) -> (i32, i32) {
    %c0_i32 = arith.constant 0 : i32
    %c0_i32_0 = arith.constant 0 : i32
    %c0_i32_1 = arith.constant 0 : i32
    return %c0_i32, %c0_i32_0 : i32, i32
  }
  func.func @transform_2(%arg0: i32) -> (i32, i32) {
    %c0_i32 = arith.constant 0 : i32
    %c0_i32_0 = arith.constant 0 : i32
    %c0_i32_1 = arith.constant 0 : i32
    return %c0_i32, %c0_i32_0 : i32, i32
  }
  func.func @transform_3(%arg0: i32) -> (i32, i32) {
    %c0_i32 = arith.constant 0 : i32
    %c0_i32_0 = arith.constant 0 : i32
    %c0_i32_1 = arith.constant 0 : i32
    return %c0_i32, %c0_i32_0 : i32, i32
  }
  func.func @transform_4(%arg0: i32) -> (i32, i32) {
    %c0_i32 = arith.constant 0 : i32
    %c0_i32_0 = arith.constant 0 : i32
    %c0_i32_1 = arith.constant 0 : i32
    return %c0_i32, %c0_i32_0 : i32, i32
  }
  func.func @transform_5(%arg0: i32) -> (i32, i32) {
    %c0_i32 = arith.constant 0 : i32
    %c0_i32_0 = arith.constant 0 : i32
    %c0_i32_1 = arith.constant 0 : i32
    return %c0_i32, %c0_i32_0 : i32, i32
  }
  func.func @transform_6(%arg0: i32) -> (i32, i32) {
    %c0_i32 = arith.constant 0 : i32
    %c0_i32_0 = arith.constant 0 : i32
    %c0_i32_1 = arith.constant 0 : i32
    return %c0_i32, %c0_i32_0 : i32, i32
  }
  func.func @transform_7(%arg0: i32) -> (i32, i32) {
    %c0_i32 = arith.constant 0 : i32
    %c0_i32_0 = arith.constant 0 : i32
    %c0_i32_1 = arith.constant 0 : i32
    return %c0_i32, %c0_i32_0 : i32, i32
  }
  func.func @transform_8(%arg0: i32) -> (i32, i32) {
    %c0_i32 = arith.constant 0 : i32
    %c0_i32_0 = arith.constant 0 : i32
    %c0_i32_1 = arith.constant 0 : i32
    return %c0_i32, %c0_i32_0 : i32, i32
  }
  func.func @transform_9(%arg0: i32) -> (i32, i32) {
    %c0_i32 = arith.constant 0 : i32
    %c0_i32_0 = arith.constant 0 : i32
    %c0_i32_1 = arith.constant 0 : i32
    return %c0_i32, %c0_i32_0 : i32, i32
  }
  func.func @transform_10(%arg0: i32) -> (i32, i32) {
    %c0_i32 = arith.constant 0 : i32
    %c0_i32_0 = arith.constant 0 : i32
    %c0_i32_1 = arith.constant 0 : i32
    return %c0_i32, %c0_i32_0 : i32, i32
  }
  func.func @transform_11(%arg0: i32) -> (i32, i32) {
    %c0_i32 = arith.constant 0 : i32
    %c0_i32_0 = arith.constant 0 : i32
    return %arg0, %c0_i32 : i32, i32
  }
}

</mosaic_0001>

<llo_original>
// kernel: net_tune_forward.1
$region0: #{net_tune_forward.1}
  #allocation0 [shape = 'u32[]', space=smem, size = 0x4, offset = 0x4, fixed_abs, tag = 'smem constant byte address 0x4 - core index']
  #allocation1 [shape = 'u32[72,128]{1,0:T(1,128)}', space=vmem, size = 0x9000, scoped, tag = 'internal scratch']
  %s0 = inlined_call_operand.hbm [shape: f32[50,256], index: 0, kind: input, shape index: {}]
  %s1 = inlined_call_operand.hbm [shape: bf16[256,128], index: 1, kind: input, shape index: {}]
  %s2 = inlined_call_operand.hbm [shape: f32[1,128], index: 2, kind: input, shape index: {}]
  %s3 = inlined_call_operand.hbm [shape: bf16[128,256], index: 3, kind: input, shape index: {}]
  %s4 = inlined_call_operand.vmem [shape: f32[1,256], index: 4, kind: input, shape index: {}]
  %s5 = inlined_call_operand.hbm [shape: bf16[256,256], index: 5, kind: input, shape index: {}]
  %s6 = inlined_call_operand.vmem [shape: f32[1,256], index: 6, kind: input, shape index: {}]
  %s7 = inlined_call_operand.hbm [shape: bf16[256,128], index: 7, kind: input, shape index: {}]
  %s8 = inlined_call_operand.vmem [shape: f32[1,128], index: 8, kind: input, shape index: {}]
  %s9 = inlined_call_operand.hbm [shape: bf16[128,128], index: 9, kind: input, shape index: {}]
  %s10 = inlined_call_operand.vmem [shape: f32[1,128], index: 10, kind: input, shape index: {}]
  %s11 = inlined_call_operand.vmem [shape: bf16[50,128], index: 11, kind: output, shape index: {}]
  %s12 = sld [smem:[#allocation0]]
  $region82: #{net_tune_forward.1} parent=0
    _
  %s14 = ssub.s32 1, %s12
  %s15 = scalar_select 0, %s14, %s12
  $region1: #{net_tune_forward.1} parent=0
    #allocation2 [shape = 'u8[57344]{0}', space=vmem, size = 0xe000, scoped, tag = 'input window, operand 0, single buffered']
    #allocation3 [shape = 's32[1]{0}', space=sflag, size = 0x4, scoped, tag = 'scoped memory for net_tune_forward.1']
    #allocation4 [shape = 'u8[65536]{0}', space=vmem, size = 0x10000, scoped, tag = 'input window, operand 1, single buffered']
    #allocation5 [shape = 's32[1]{0}', space=sflag, size = 0x4, scoped, tag = 'scoped memory for net_tune_forward.1']
    #allocation6 [shape = 'u8[512]{0}', space=vmem, size = 0x400, scoped, tag = 'input window, operand 2, single buffered']
    #allocation7 [shape = 'u8[65536]{0}', space=vmem, size = 0x10000, scoped, tag = 'input window, operand 3, single buffered']
    #allocation8 [shape = 's32[1]{0}', space=sflag, size = 0x4, scoped, tag = 'scoped memory for net_tune_forward.1']
    #allocation9 [shape = 'u8[131072]{0}', space=vmem, size = 0x20000, scoped, tag = 'input window, operand 5, single buffered']
    #allocation10 [shape = 'u8[65536]{0}', space=vmem, size = 0x10000, scoped, tag = 'input window, operand 7, single buffered']
    #allocation11 [shape = 's32[1]{0}', space=sflag, size = 0x4, scoped, tag = 'scoped memory for net_tune_forward.1']
    #allocation12 [shape = 'u8[32768]{0}', space=vmem, size = 0x8000, scoped, tag = 'input window, operand 9, single buffered']
    %16 = vsyncpa [#allocation3], 0
    %17 = vsyncpa [#allocation5], 0
    %18 = vsyncpa [#allocation8], 0
    %19 = vsyncpa [#allocation11], 0
    // Predicated region
    $region2: #{net_tune_forward.1} parent=1 // pred_check
      _
    $region3: #{net_tune_forward.1} parent=1 // pred_check_branch
      %21 = sbr.rel (0) target = $region5
    $region4: #{net_tune_forward.1} parent=1 // pred_region
      %23 = vsyncadd [#allocation3], 0
      %s24 = sshll.u32 %s0, 4
      %s25 = int_to_ptr.hbm [resolvable:$true] %s24
      %s26 = sshll.u32 [#allocation2], 4
      %s27 = int_to_ptr.vmem [resolvable:$true] %s26
      %32 = dma.hbm_to_vmem [thread:$0]  %s25, 1792, %s27, [#allocation3], 256, 256, 16
    $region5: #{net_tune_forward.1} parent=1 // pred_fallthru
      _
    // Predicated region
    $region6: #{net_tune_forward.1} parent=1 // pred_check
      _
    $region7: #{net_tune_forward.1} parent=1 // pred_check_branch
      %34 = sbr.rel (0) target = $region9
    $region8: #{net_tune_forward.1} parent=1 // pred_region
      %36 = vsyncadd [#allocation5], 0
      %s37 = sshll.u32 %s1, 4
      %s38 = int_to_ptr.hbm [resolvable:$true] %s37
      %s39 = sshll.u32 [#allocation4], 4
      %s40 = int_to_ptr.vmem [resolvable:$true] %s39
      %45 = dma.hbm_to_vmem [thread:$0]  %s38, 2048, %s40, [#allocation5], 64, 64, 4
    $region9: #{net_tune_forward.1} parent=1 // pred_fallthru
      _
    // Predicated region
    $region10: #{net_tune_forward.1} parent=1 // pred_check
      _
    $region11: #{net_tune_forward.1} parent=1 // pred_check_branch
      %47 = sbr.rel (0) target = $region13
    $region12: #{net_tune_forward.1} parent=1 // pred_region
      %49 = vsyncadd [#allocation5], 0
      %s51 = sshll.u32 %s2, 4
      %s52 = int_to_ptr.hbm [resolvable:$true] %s51
      %s53 = sshll.u32 [#allocation6], 4
      %s54 = int_to_ptr.vmem [resolvable:$true] %s53
      %56 = dma.hbm_to_vmem [thread:$0]  %s52, 16, %s54, [#allocation5]
    $region13: #{net_tune_forward.1} parent=1 // pred_fallthru
      _
    // Predicated region
    $region14: #{net_tune_forward.1} parent=1 // pred_check
      _
    $region15: #{net_tune_forward.1} parent=1 // pred_check_branch
      %58 = sbr.rel (0) target = $region17
    $region16: #{net_tune_forward.1} parent=1 // pred_region
      %60 = vsyncadd [#allocation8], 0
      %s61 = sshll.u32 %s3, 4
      %s62 = int_to_ptr.hbm [resolvable:$true] %s61
      %s63 = sshll.u32 [#allocation7], 4
      %s64 = int_to_ptr.vmem [resolvable:$true] %s63
      %69 = dma.hbm_to_vmem [thread:$0]  %s62, 2048, %s64, [#allocation8], 128, 128, 8
    $region17: #{net_tune_forward.1} parent=1 // pred_fallthru
      _
    // Predicated region
    $region18: #{net_tune_forward.1} parent=1 // pred_check
      _
    $region19: #{net_tune_forward.1} parent=1 // pred_check_branch
      %71 = sbr.rel (0) target = $region21
    $region20: #{net_tune_forward.1} parent=1 // pred_region
      _
    $region21: #{net_tune_forward.1} parent=1 // pred_fallthru
      _
    // Predicated region
    $region22: #{net_tune_forward.1} parent=1 // pred_check
      _
    $region23: #{net_tune_forward.1} parent=1 // pred_check_branch
      %73 = sbr.rel (0) target = $region25
    $region24: #{net_tune_forward.1} parent=1 // pred_region
      %75 = vsyncadd [#allocation8], 0
      %s76 = sshll.u32 %s5, 4
      %s77 = int_to_ptr.hbm [resolvable:$true] %s76
      %s78 = sshll.u32 [#allocation9], 4
      %s79 = int_to_ptr.vmem [resolvable:$true] %s78
      %84 = dma.hbm_to_vmem [thread:$0]  %s77, 4096, %s79, [#allocation8], 128, 128, 8
    $region25: #{net_tune_forward.1} parent=1 // pred_fallthru
      _
    // Predicated region
    $region26: #{net_tune_forward.1} parent=1 // pred_check
      _
    $region27: #{net_tune_forward.1} parent=1 // pred_check_branch
      %86 = sbr.rel (0) target = $region29
    $region28: #{net_tune_forward.1} parent=1 // pred_region
      _
    $region29: #{net_tune_forward.1} parent=1 // pred_fallthru
      _
    // Predicated region
    $region30: #{net_tune_forward.1} parent=1 // pred_check
      _
    $region31: #{net_tune_forward.1} parent=1 // pred_check_branch
      %88 = sbr.rel (0) target = $region33
    $region32: #{net_tune_forward.1} parent=1 // pred_region
      %90 = vsyncadd [#allocation11], 0
      %s91 = sshll.u32 %s7, 4
      %s92 = int_to_ptr.hbm [resolvable:$true] %s91
      %s93 = sshll.u32 [#allocation10], 4
      %s94 = int_to_ptr.vmem [resolvable:$true] %s93
      %99 = dma.hbm_to_vmem [thread:$0]  %s92, 2048, %s94, [#allocation11], 64, 64, 4
    $region33: #{net_tune_forward.1} parent=1 // pred_fallthru
      _
    // Predicated region
    $region34: #{net_tune_forward.1} parent=1 // pred_check
      _
    $region35: #{net_tune_forward.1} parent=1 // pred_check_branch
      %101 = sbr.rel (0) target = $region37
    $region36: #{net_tune_forward.1} parent=1 // pred_region
      _
    $region37: #{net_tune_forward.1} parent=1 // pred_fallthru
      _
    // Predicated region
    $region38: #{net_tune_forward.1} parent=1 // pred_check
      _
    $region39: #{net_tune_forward.1} parent=1 // pred_check_branch
      %103 = sbr.rel (0) target = $region41
    $region40: #{net_tune_forward.1} parent=1 // pred_region
      %105 = vsyncadd [#allocation11], 0
      %s106 = sshll.u32 %s9, 4
      %s107 = int_to_ptr.hbm [resolvable:$true] %s106
      %s108 = sshll.u32 [#allocation12], 4
      %s109 = int_to_ptr.vmem [resolvable:$true] %s108
      %114 = dma.hbm_to_vmem [thread:$0]  %s107, 1024, %s109, [#allocation11], 64, 64, 4
    $region41: #{net_tune_forward.1} parent=1 // pred_fallthru
      _
    // Predicated region
    $region42: #{net_tune_forward.1} parent=1 // pred_check
      _
    $region43: #{net_tune_forward.1} parent=1 // pred_check_branch
      %116 = sbr.rel (0) target = $region45
    $region44: #{net_tune_forward.1} parent=1 // pred_region
      _
    $region45: #{net_tune_forward.1} parent=1 // pred_fallthru
      _
    // Predicated region
    $region46: #{net_tune_forward.1} parent=1 // pred_check
      _
    $region47: #{net_tune_forward.1} parent=1 // pred_check_branch
      %118 = sbr.rel (0) target = $region49
    $region48: #{net_tune_forward.1} parent=1 // pred_region
      %120 = dma.done [#allocation3], 1792
    $region49: #{net_tune_forward.1} parent=1 // pred_fallthru
      _
    // Predicated region
    $region50: #{net_tune_forward.1} parent=1 // pred_check
      _
    $region51: #{net_tune_forward.1} parent=1 // pred_check_branch
      %122 = sbr.rel (0) target = $region53
    $region52: #{net_tune_forward.1} parent=1 // pred_region
      %124 = dma.done [#allocation5], 2048
    $region53: #{net_tune_forward.1} parent=1 // pred_fallthru
      _
    // Predicated region
    $region54: #{net_tune_forward.1} parent=1 // pred_check
      _
    $region55: #{net_tune_forward.1} parent=1 // pred_check_branch
      %126 = sbr.rel (0) target = $region57
    $region56: #{net_tune_forward.1} parent=1 // pred_region
      %128 = dma.done [#allocation5], 16
    $region57: #{net_tune_forward.1} parent=1 // pred_fallthru
      _
    // Predicated region
    $region58: #{net_tune_forward.1} parent=1 // pred_check
      _
    $region59: #{net_tune_forward.1} parent=1 // pred_check_branch
      %130 = sbr.rel (0) target = $region61
    $region60: #{net_tune_forward.1} parent=1 // pred_region
      %132 = dma.done [#allocation8], 2048
    $region61: #{net_tune_forward.1} parent=1 // pred_fallthru
      _
    // Predicated region
    $region62: #{net_tune_forward.1} parent=1 // pred_check
      _
    $region63: #{net_tune_forward.1} parent=1 // pred_check_branch
      %134 = sbr.rel (0) target = $region65
    $region64: #{net_tune_forward.1} parent=1 // pred_region
      %136 = dma.done [#allocation8], 4096
    $region65: #{net_tune_forward.1} parent=1 // pred_fallthru
      _
    // Predicated region
    $region66: #{net_tune_forward.1} parent=1 // pred_check
      _
    $region67: #{net_tune_forward.1} parent=1 // pred_check_branch
      %138 = sbr.rel (0) target = $region69
    $region68: #{net_tune_forward.1} parent=1 // pred_region
      %140 = dma.done [#allocation11], 2048
    $region69: #{net_tune_forward.1} parent=1 // pred_fallthru
      _
    // Predicated region
    $region70: #{net_tune_forward.1} parent=1 // pred_check
      _
    $region71: #{net_tune_forward.1} parent=1 // pred_check_branch
      %142 = sbr.rel (0) target = $region73
    $region72: #{net_tune_forward.1} parent=1 // pred_region
      %144 = dma.done [#allocation11], 1024
    $region73: #{net_tune_forward.1} parent=1 // pred_fallthru
      _
    %v145 = vld [vmem:[#allocation2] sm:$0xff]
    %v146 = vld [vmem:[#allocation2 + $0x8] sm:$0xff]
    %v147 = vld [vmem:[#allocation2 + $0x10] sm:$0xff]
    %v148 = vld [vmem:[#allocation2 + $0x18] sm:$0xff]
    %v149 = vld [vmem:[#allocation2 + $0x20] sm:$0xff]
    %v150 = vld [vmem:[#allocation2 + $0x28] sm:$0xff]
    %v151 = vld [vmem:[#allocation2 + $0x30] sm:$0xff]
    %v152 = vld [vmem:[#allocation2 + $0x38] sm:$0xff]
    %v153 = vld [vmem:[#allocation2 + $0x40] sm:$0xff]
    %v154 = vld [vmem:[#allocation2 + $0x48] sm:$0xff]
    %v155 = vld [vmem:[#allocation2 + $0x50] sm:$0xff]
    %v156 = vld [vmem:[#allocation2 + $0x58] sm:$0xff]
    %v157 = vld [vmem:[#allocation2 + $0x60] sm:$0x3]
    %v158 = vld [vmem:[#allocation2 + $0x68] sm:$0x3]
    %v159 = vpack.c.bf16 %v147, %v145
    %v160 = vpack.c.bf16 %v148, %v146
    %v161 = vpack.c.bf16 %v151, %v149
    %v162 = vpack.c.bf16 %v152, %v150
    %v163 = vpack.c.bf16 %v155, %v153
    %v164 = vpack.c.bf16 %v156, %v154
    %v165 = vpack.c.bf16 %v157, %v157
    %v166 = vpack.c.bf16 %v158, %v158
    %v167 = vld [vmem:[#allocation4] sm:$0xf]
    %v168 = vld [vmem:[#allocation4 + $0x4] sm:$0xf]
    %v169 = vld [vmem:[#allocation4 + $0x8] sm:$0xf]
    %v170 = vld [vmem:[#allocation4 + $0xc] sm:$0xf]
    %v171 = vld [vmem:[#allocation4 + $0x10] sm:$0xf]
    %v172 = vld [vmem:[#allocation4 + $0x14] sm:$0xf]
    %v173 = vld [vmem:[#allocation4 + $0x18] sm:$0xf]
    %v174 = vld [vmem:[#allocation4 + $0x1c] sm:$0xf]
    %v175 = vld [vmem:[#allocation4 + $0x20] sm:$0xf]
    %v176 = vld [vmem:[#allocation4 + $0x24] sm:$0xf]
    %v177 = vld [vmem:[#allocation4 + $0x28] sm:$0xf]
    %v178 = vld [vmem:[#allocation4 + $0x2c] sm:$0xf]
    %v179 = vld [vmem:[#allocation4 + $0x30] sm:$0xf]
    %v180 = vld [vmem:[#allocation4 + $0x34] sm:$0xf]
    %v181 = vld [vmem:[#allocation4 + $0x38] sm:$0xf]
    %v182 = vld [vmem:[#allocation4 + $0x3c] sm:$0xf]
    %v183 = vld [vmem:[#allocation4 + $0x40] sm:$0xf]
    %v184 = vld [vmem:[#allocation4 + $0x44] sm:$0xf]
    %v185 = vld [vmem:[#allocation4 + $0x48] sm:$0xf]
    %v186 = vld [vmem:[#allocation4 + $0x4c] sm:$0xf]
    %v187 = vld [vmem:[#allocation4 + $0x50] sm:$0xf]
    %v188 = vld [vmem:[#allocation4 + $0x54] sm:$0xf]
    %v189 = vld [vmem:[#allocation4 + $0x58] sm:$0xf]
    %v190 = vld [vmem:[#allocation4 + $0x5c] sm:$0xf]
    %v191 = vld [vmem:[#allocation4 + $0x60] sm:$0xf]
    %v192 = vld [vmem:[#allocation4 + $0x64] sm:$0xf]
    %v193 = vld [vmem:[#allocation4 + $0x68] sm:$0xf]
    %v194 = vld [vmem:[#allocation4 + $0x6c] sm:$0xf]
    %v195 = vld [vmem:[#allocation4 + $0x70] sm:$0xf]
    %v196 = vld [vmem:[#allocation4 + $0x74] sm:$0xf]
    %v197 = vld [vmem:[#allocation4 + $0x78] sm:$0xf]
    %v198 = vld [vmem:[#allocation4 + $0x7c] sm:$0xf]
    %v199 = vld [vmem:[#allocation6] sm:$0x1]
    %v201 = vperm.slane %v199, 0
    %v235 = vunpack.c.l.b16 %v167
    %v236 = vunpack.c.l.b16 %v168
    %v237 = vunpack.c.l.b16 %v169
    %v238 = vunpack.c.l.b16 %v170
    %v239 = vunpack.c.l.b16 %v171
    %v240 = vunpack.c.l.b16 %v172
    %v241 = vunpack.c.l.b16 %v173
    %v242 = vunpack.c.l.b16 %v174
    %v243 = vunpack.c.l.b16 %v175
    %v244 = vunpack.c.l.b16 %v176
    %v245 = vunpack.c.l.b16 %v177
    %v246 = vunpack.c.l.b16 %v178
    %v247 = vunpack.c.l.b16 %v179
    %v248 = vunpack.c.l.b16 %v180
    %v249 = vunpack.c.l.b16 %v181
    %v250 = vunpack.c.l.b16 %v182
    %v251 = vunpack.c.l.b16 %v183
    %v252 = vunpack.c.l.b16 %v184
    %v253 = vunpack.c.l.b16 %v185
    %v254 = vunpack.c.l.b16 %v186
    %v255 = vunpack.c.l.b16 %v187
    %v256 = vunpack.c.l.b16 %v188
    %v257 = vunpack.c.l.b16 %v189
    %v258 = vunpack.c.l.b16 %v190
    %v259 = vunpack.c.l.b16 %v191
    %v260 = vunpack.c.l.b16 %v192
    %v261 = vunpack.c.l.b16 %v193
    %v262 = vunpack.c.l.b16 %v194
    %v263 = vunpack.c.l.b16 %v195
    %v264 = vunpack.c.l.b16 %v196
    %v265 = vunpack.c.l.b16 %v197
    %v266 = vunpack.c.l.b16 %v198
    %v267 = vpack.c.b16 %v236, %v235
    %v268 = vpack.c.b16 %v238, %v237
    %v269 = vpack.c.b16 %v240, %v239
    %v270 = vpack.c.b16 %v242, %v241
    %v271 = vpack.c.b16 %v244, %v243
    %v272 = vpack.c.b16 %v246, %v245
    %v273 = vpack.c.b16 %v248, %v247
    %v274 = vpack.c.b16 %v250, %v249
    %v275 = vpack.c.b16 %v252, %v251
    %v276 = vpack.c.b16 %v254, %v253
    %v277 = vpack.c.b16 %v256, %v255
    %v278 = vpack.c.b16 %v258, %v257
    %v279 = vpack.c.b16 %v260, %v259
    %v280 = vpack.c.b16 %v262, %v261
    %v281 = vpack.c.b16 %v264, %v263
    %v282 = vpack.c.b16 %v266, %v265
    %299 = vmatpush.bf16.msra.mxu0 %v274
    %300 = vmatpush.bf16.msra.mxu0 %v273
    %301 = vmatpush.bf16.msra.mxu0 %v272
    %302 = vmatpush.bf16.msra.mxu0 %v271
    %303 = vmatpush.bf16.msra.mxu0 %v270
    %304 = vmatpush.bf16.msra.mxu0 %v269
    %305 = vmatpush.bf16.msra.mxu0 %v268
    %306 = vmatpush.bf16.msra.mxu0 %v267
    %307 = vmatmul.bf16.gmra.mxu0 %v159
    %v308 = vpop.f32.mrf.mxu0
    %v309 = vadd.f32 %v201, %v308
    %v310 = vpop.f32.mrf.mxu0
    %v311 = vadd.f32 %v201, %v310
    %312 = vmatmul.bf16.gmra.mxu0 %v161
    %v313 = vpop.f32.mrf.mxu0
    %v314 = vadd.f32 %v201, %v313
    %v315 = vpop.f32.mrf.mxu0
    %v316 = vadd.f32 %v201, %v315
    %317 = vmatmul.bf16.gmra.mxu0 %v163
    %v318 = vpop.f32.mrf.mxu0
    %v319 = vadd.f32 %v201, %v318
    %v320 = vpop.f32.mrf.mxu0
    %v321 = vadd.f32 %v201, %v320
    %322 = vmatmul.bf16.gmra.mxu0 %v165
    %v323 = vpop.f32.mrf.mxu0
    %v324 = vadd.f32 %v201, %v323
    %v325 = vpop.f32.mrf.mxu0
    %326 = vdwg.mxu0
    %327 = vmatpush.bf16.msra.mxu0 %v282
    %328 = vmatpush.bf16.msra.mxu0 %v281
    %329 = vmatpush.bf16.msra.mxu0 %v280
    %330 = vmatpush.bf16.msra.mxu0 %v279
    %331 = vmatpush.bf16.msra.mxu0 %v278
    %332 = vmatpush.bf16.msra.mxu0 %v277
    %333 = vmatpush.bf16.msra.mxu0 %v276
    %334 = vmatpush.bf16.msra.mxu0 %v275
    %335 = vmatmul.bf16.gmra.mxu0 %v160
    %v336 = vpop.f32.mrf.mxu0
    %v337 = vadd.f32 %v309, %v336
    %v338 = vpop.f32.mrf.mxu0
    %v339 = vadd.f32 %v311, %v338
    %340 = vmatmul.bf16.gmra.mxu0 %v162
    %v341 = vpop.f32.mrf.mxu0
    %v342 = vadd.f32 %v314, %v341
    %v343 = vpop.f32.mrf.mxu0
    %v344 = vadd.f32 %v316, %v343
    %345 = vmatmul.bf16.gmra.mxu0 %v164
    %v346 = vpop.f32.mrf.mxu0
    %v347 = vadd.f32 %v319, %v346
    %v348 = vpop.f32.mrf.mxu0
    %v349 = vadd.f32 %v321, %v348
    %350 = vmatmul.bf16.gmra.mxu0 %v166
    %v351 = vpop.f32.mrf.mxu0
    %v352 = vadd.f32 %v324, %v351
    %v353 = vpop.f32.mrf.mxu0
    %354 = vdwg.mxu0
    %vm355 = vcmp.ge.f32.partialorder %v337, 0.0
    %vm356 = vcmp.ge.f32.partialorder %v339, 0.0
    %vm357 = vcmp.ge.f32.partialorder %v342, 0.0
    %vm358 = vcmp.ge.f32.partialorder %v344, 0.0
    %vm359 = vcmp.ge.f32.partialorder %v347, 0.0
    %vm360 = vcmp.ge.f32.partialorder %v349, 0.0
    %vm361 = vcmp.ge.f32.partialorder %v352, 0.0
    %v362 = vmul.f32 %v337, 0.22916667
    %v363 = vmul.f32 %v339, 0.22916667
    %v364 = vmul.f32 %v342, 0.22916667
    %v365 = vmul.f32 %v344, 0.22916667
    %v366 = vmul.f32 %v347, 0.22916667
    %v367 = vmul.f32 %v349, 0.22916667
    %v368 = vmul.f32 %v352, 0.22916667
    %v369 = vsel %vm355, %v337, %v362
    %v370 = vsel %vm356, %v339, %v363
    %v371 = vsel %vm357, %v342, %v364
    %v372 = vsel %vm358, %v344, %v365
    %v373 = vsel %vm359, %v347, %v366
    %v374 = vsel %vm360, %v349, %v367
    %v375 = vsel %vm361, %v352, %v368
    %v376 = vpack.c.bf16 %v370, %v369
    %v377 = vpack.c.bf16 %v372, %v371
    %v378 = vpack.c.bf16 %v374, %v373
    %v379 = vpack.c.bf16 %v375, %v375
    %v380 = vld [vmem:[#allocation7] sm:$0xff]
    %v381 = vld [vmem:[#allocation7 + $0x8] sm:$0xff]
    %v382 = vld [vmem:[#allocation7 + $0x10] sm:$0xff]
    %v383 = vld [vmem:[#allocation7 + $0x18] sm:$0xff]
    %v384 = vld [vmem:[#allocation7 + $0x20] sm:$0xff]
    %v385 = vld [vmem:[#allocation7 + $0x28] sm:$0xff]
    %v386 = vld [vmem:[#allocation7 + $0x30] sm:$0xff]
    %v387 = vld [vmem:[#allocation7 + $0x38] sm:$0xff]
    %v388 = vld [vmem:[#allocation7 + $0x40] sm:$0xff]
    %v389 = vld [vmem:[#allocation7 + $0x48] sm:$0xff]
    %v390 = vld [vmem:[#allocation7 + $0x50] sm:$0xff]
    %v391 = vld [vmem:[#allocation7 + $0x58] sm:$0xff]
    %v392 = vld [vmem:[#allocation7 + $0x60] sm:$0xff]
    %v393 = vld [vmem:[#allocation7 + $0x68] sm:$0xff]
    %v394 = vld [vmem:[#allocation7 + $0x70] sm:$0xff]
    %v395 = vld [vmem:[#allocation7 + $0x78] sm:$0xff]
    %v396 = vld [vmem:[%s4] sm:$0x3]
    %v398 = vperm.slane %v396, 0
    %v399 = vperm.slane %v396, 1
    %v418 = vunpack.c.l.b16 %v380
    %v419 = vunpack.c.h.b16 %v380
    %v420 = vunpack.c.l.b16 %v381
    %v421 = vunpack.c.h.b16 %v381
    %v422 = vunpack.c.l.b16 %v382
    %v423 = vunpack.c.h.b16 %v382
    %v424 = vunpack.c.l.b16 %v383
    %v425 = vunpack.c.h.b16 %v383
    %v426 = vunpack.c.l.b16 %v384
    %v427 = vunpack.c.h.b16 %v384
    %v428 = vunpack.c.l.b16 %v385
    %v429 = vunpack.c.h.b16 %v385
    %v430 = vunpack.c.l.b16 %v386
    %v431 = vunpack.c.h.b16 %v386
    %v432 = vunpack.c.l.b16 %v387
    %v433 = vunpack.c.h.b16 %v387
    %v434 = vunpack.c.l.b16 %v388
    %v435 = vunpack.c.h.b16 %v388
    %v436 = vunpack.c.l.b16 %v389
    %v437 = vunpack.c.h.b16 %v389
    %v438 = vunpack.c.l.b16 %v390
    %v439 = vunpack.c.h.b16 %v390
    %v440 = vunpack.c.l.b16 %v391
    %v441 = vunpack.c.h.b16 %v391
    %v442 = vunpack.c.l.b16 %v392
    %v443 = vunpack.c.h.b16 %v392
    %v444 = vunpack.c.l.b16 %v393
    %v445 = vunpack.c.h.b16 %v393
    %v446 = vunpack.c.l.b16 %v394
    %v447 = vunpack.c.h.b16 %v394
    %v448 = vunpack.c.l.b16 %v395
    %v449 = vunpack.c.h.b16 %v395
    %v450 = vpack.c.b16 %v420, %v418
    %v451 = vpack.c.b16 %v421, %v419
    %v452 = vpack.c.b16 %v424, %v422
    %v453 = vpack.c.b16 %v425, %v423
    %v454 = vpack.c.b16 %v428, %v426
    %v455 = vpack.c.b16 %v429, %v427
    %v456 = vpack.c.b16 %v432, %v430
    %v457 = vpack.c.b16 %v433, %v431
    %v458 = vpack.c.b16 %v436, %v434
    %v459 = vpack.c.b16 %v437, %v435
    %v460 = vpack.c.b16 %v440, %v438
    %v461 = vpack.c.b16 %v441, %v439
    %v462 = vpack.c.b16 %v444, %v442
    %v463 = vpack.c.b16 %v445, %v443
    %v464 = vpack.c.b16 %v448, %v446
    %v465 = vpack.c.b16 %v449, %v447
    %482 = vmatpush.bf16.msra.mxu0 %v464
    %483 = vmatpush.bf16.msra.mxu0 %v462
    %484 = vmatpush.bf16.msra.mxu0 %v460
    %485 = vmatpush.bf16.msra.mxu0 %v458
    %486 = vmatpush.bf16.msra.mxu0 %v456
    %487 = vmatpush.bf16.msra.mxu0 %v454
    %488 = vmatpush.bf16.msra.mxu0 %v452
    %489 = vmatpush.bf16.msra.mxu0 %v450
    %490 = vmatmul.bf16.gmra.mxu0 %v376
    %v491 = vpop.f32.mrf.mxu0
    %v492 = vadd.f32 %v398, %v491
    %v493 = vpop.f32.mrf.mxu0
    %v494 = vadd.f32 %v398, %v493
    %495 = vmatmul.bf16.gmra.mxu0 %v377
    %v496 = vpop.f32.mrf.mxu0
    %v497 = vadd.f32 %v398, %v496
    %v498 = vpop.f32.mrf.mxu0
    %v499 = vadd.f32 %v398, %v498
    %500 = vmatmul.bf16.gmra.mxu0 %v378
    %v501 = vpop.f32.mrf.mxu0
    %v502 = vadd.f32 %v398, %v501
    %v503 = vpop.f32.mrf.mxu0
    %v504 = vadd.f32 %v398, %v503
    %505 = vmatmul.bf16.gmra.mxu0 %v379
    %v506 = vpop.f32.mrf.mxu0
    %v507 = vadd.f32 %v398, %v506
    %v508 = vpop.f32.mrf.mxu0
    %509 = vdwg.mxu0
    %510 = vmatpush.bf16.msra.mxu0 %v465
    %511 = vmatpush.bf16.msra.mxu0 %v463
    %512 = vmatpush.bf16.msra.mxu0 %v461
    %513 = vmatpush.bf16.msra.mxu0 %v459
    %514 = vmatpush.bf16.msra.mxu0 %v457
    %515 = vmatpush.bf16.msra.mxu0 %v455
    %516 = vmatpush.bf16.msra.mxu0 %v453
    %517 = vmatpush.bf16.msra.mxu0 %v451
    %518 = vmatmul.bf16.gmra.mxu0 %v376
    %v519 = vpop.f32.mrf.mxu0
    %v520 = vadd.f32 %v399, %v519
    %v521 = vpop.f32.mrf.mxu0
    %v522 = vadd.f32 %v399, %v521
    %523 = vmatmul.bf16.gmra.mxu0 %v377
    %v524 = vpop.f32.mrf.mxu0
    %v525 = vadd.f32 %v399, %v524
    %v526 = vpop.f32.mrf.mxu0
    %v527 = vadd.f32 %v399, %v526
    %528 = vmatmul.bf16.gmra.mxu0 %v378
    %v529 = vpop.f32.mrf.mxu0
    %v530 = vadd.f32 %v399, %v529
    %v531 = vpop.f32.mrf.mxu0
    %v532 = vadd.f32 %v399, %v531
    %533 = vmatmul.bf16.gmra.mxu0 %v379
    %v534 = vpop.f32.mrf.mxu0
    %v535 = vadd.f32 %v399, %v534
    %v536 = vpop.f32.mrf.mxu0
    %537 = vdwg.mxu0
    %vm538 = vcmp.ge.f32.partialorder %v492, 0.0
    %vm539 = vcmp.ge.f32.partialorder %v520, 0.0
    %vm540 = vcmp.ge.f32.partialorder %v494, 0.0
    %vm541 = vcmp.ge.f32.partialorder %v522, 0.0
    %vm542 = vcmp.ge.f32.partialorder %v497, 0.0
    %vm543 = vcmp.ge.f32.partialorder %v525, 0.0
    %vm544 = vcmp.ge.f32.partialorder %v499, 0.0
    %vm545 = vcmp.ge.f32.partialorder %v527, 0.0
    %vm546 = vcmp.ge.f32.partialorder %v502, 0.0
    %vm547 = vcmp.ge.f32.partialorder %v530, 0.0
    %vm548 = vcmp.ge.f32.partialorder %v504, 0.0
    %vm549 = vcmp.ge.f32.partialorder %v532, 0.0
    %vm550 = vcmp.ge.f32.partialorder %v507, 0.0
    %vm551 = vcmp.ge.f32.partialorder %v535, 0.0
    %v552 = vmul.f32 %v492, 0.22916667
    %v553 = vmul.f32 %v520, 0.22916667
    %v554 = vmul.f32 %v494, 0.22916667
    %v555 = vmul.f32 %v522, 0.22916667
    %v556 = vmul.f32 %v497, 0.22916667
    %v557 = vmul.f32 %v525, 0.22916667
    %v558 = vmul.f32 %v499, 0.22916667
    %v559 = vmul.f32 %v527, 0.22916667
    %v560 = vmul.f32 %v502, 0.22916667
    %v561 = vmul.f32 %v530, 0.22916667
    %v562 = vmul.f32 %v504, 0.22916667
    %v563 = vmul.f32 %v532, 0.22916667
    %v564 = vmul.f32 %v507, 0.22916667
    %v565 = vmul.f32 %v535, 0.22916667
    %v566 = vsel %vm538, %v492, %v552
    %v567 = vsel %vm539, %v520, %v553
    %v568 = vsel %vm540, %v494, %v554
    %v569 = vsel %vm541, %v522, %v555
    %v570 = vsel %vm542, %v497, %v556
    %v571 = vsel %vm543, %v525, %v557
    %v572 = vsel %vm544, %v499, %v558
    %v573 = vsel %vm545, %v527, %v559
    %v574 = vsel %vm546, %v502, %v560
    %v575 = vsel %vm547, %v530, %v561
    %v576 = vsel %vm548, %v504, %v562
    %v577 = vsel %vm549, %v532, %v563
    %v578 = vsel %vm550, %v507, %v564
    %v579 = vsel %vm551, %v535, %v565
    %v580 = vpack.c.bf16 %v568, %v566
    %v581 = vpack.c.bf16 %v569, %v567
    %v582 = vpack.c.bf16 %v572, %v570
    %v583 = vpack.c.bf16 %v573, %v571
    %v584 = vpack.c.bf16 %v576, %v574
    %v585 = vpack.c.bf16 %v577, %v575
    %v586 = vpack.c.bf16 %v578, %v578
    %v587 = vpack.c.bf16 %v579, %v579
    %v588 = vld [vmem:[#allocation9] sm:$0xff]
    %v589 = vld [vmem:[#allocation9 + $0x8] sm:$0xff]
    %v590 = vld [vmem:[#allocation9 + $0x10] sm:$0xff]
    %v591 = vld [vmem:[#allocation9 + $0x18] sm:$0xff]
    %v592 = vld [vmem:[#allocation9 + $0x20] sm:$0xff]
    %v593 = vld [vmem:[#allocation9 + $0x28] sm:$0xff]
    %v594 = vld [vmem:[#allocation9 + $0x30] sm:$0xff]
    %v595 = vld [vmem:[#allocation9 + $0x38] sm:$0xff]
    %v596 = vld [vmem:[#allocation9 + $0x40] sm:$0xff]
    %v597 = vld [vmem:[#allocation9 + $0x48] sm:$0xff]
    %v598 = vld [vmem:[#allocation9 + $0x50] sm:$0xff]
    %v599 = vld [vmem:[#allocation9 + $0x58] sm:$0xff]
    %v600 = vld [vmem:[#allocation9 + $0x60] sm:$0xff]
    %v601 = vld [vmem:[#allocation9 + $0x68] sm:$0xff]
    %v602 = vld [vmem:[#allocation9 + $0x70] sm:$0xff]
    %v603 = vld [vmem:[#allocation9 + $0x78] sm:$0xff]
    %v604 = vld [vmem:[#allocation9 + $0x80] sm:$0xff]
    %v605 = vld [vmem:[#allocation9 + $0x88] sm:$0xff]
    %v606 = vld [vmem:[#allocation9 + $0x90] sm:$0xff]
    %v607 = vld [vmem:[#allocation9 + $0x98] sm:$0xff]
    %v608 = vld [vmem:[#allocation9 + $0xa0] sm:$0xff]
    %v609 = vld [vmem:[#allocation9 + $0xa8] sm:$0xff]
    %v610 = vld [vmem:[#allocation9 + $0xb0] sm:$0xff]
    %v611 = vld [vmem:[#allocation9 + $0xb8] sm:$0xff]
    %v612 = vld [vmem:[#allocation9 + $0xc0] sm:$0xff]
    %v613 = vld [vmem:[#allocation9 + $0xc8] sm:$0xff]
    %v614 = vld [vmem:[#allocation9 + $0xd0] sm:$0xff]
    %v615 = vld [vmem:[#allocation9 + $0xd8] sm:$0xff]
    %v616 = vld [vmem:[#allocation9 + $0xe0] sm:$0xff]
    %v617 = vld [vmem:[#allocation9 + $0xe8] sm:$0xff]
    %v618 = vld [vmem:[#allocation9 + $0xf0] sm:$0xff]
    %v619 = vld [vmem:[#allocation9 + $0xf8] sm:$0xff]
    %v620 = vld [vmem:[%s6] sm:$0x3]
    %v622 = vperm.slane %v620, 0
    %v623 = vperm.slane %v620, 1
    %v658 = vunpack.c.l.b16 %v588
    %v659 = vunpack.c.h.b16 %v588
    %v660 = vunpack.c.l.b16 %v589
    %v661 = vunpack.c.h.b16 %v589
    %v662 = vunpack.c.l.b16 %v590
    %v663 = vunpack.c.h.b16 %v590
    %v664 = vunpack.c.l.b16 %v591
    %v665 = vunpack.c.h.b16 %v591
    %v666 = vunpack.c.l.b16 %v592
    %v667 = vunpack.c.h.b16 %v592
    %v668 = vunpack.c.l.b16 %v593
    %v669 = vunpack.c.h.b16 %v593
    %v670 = vunpack.c.l.b16 %v594
    %v671 = vunpack.c.h.b16 %v594
    %v672 = vunpack.c.l.b16 %v595
    %v673 = vunpack.c.h.b16 %v595
    %v674 = vunpack.c.l.b16 %v596
    %v675 = vunpack.c.h.b16 %v596
    %v676 = vunpack.c.l.b16 %v597
    %v677 = vunpack.c.h.b16 %v597
    %v678 = vunpack.c.l.b16 %v598
    %v679 = vunpack.c.h.b16 %v598
    %v680 = vunpack.c.l.b16 %v599
    %v681 = vunpack.c.h.b16 %v599
    %v682 = vunpack.c.l.b16 %v600
    %v683 = vunpack.c.h.b16 %v600
    %v684 = vunpack.c.l.b16 %v601
    %v685 = vunpack.c.h.b16 %v601
    %v686 = vunpack.c.l.b16 %v602
    %v687 = vunpack.c.h.b16 %v602
    %v688 = vunpack.c.l.b16 %v603
    %v689 = vunpack.c.h.b16 %v603
    %v690 = vunpack.c.l.b16 %v604
    %v691 = vunpack.c.h.b16 %v604
    %v692 = vunpack.c.l.b16 %v605
    %v693 = vunpack.c.h.b16 %v605
    %v694 = vunpack.c.l.b16 %v606
    %v695 = vunpack.c.h.b16 %v606
    %v696 = vunpack.c.l.b16 %v607
    %v697 = vunpack.c.h.b16 %v607
    %v698 = vunpack.c.l.b16 %v608
    %v699 = vunpack.c.h.b16 %v608
    %v700 = vunpack.c.l.b16 %v609
    %v701 = vunpack.c.h.b16 %v609
    %v702 = vunpack.c.l.b16 %v610
    %v703 = vunpack.c.h.b16 %v610
    %v704 = vunpack.c.l.b16 %v611
    %v705 = vunpack.c.h.b16 %v611
    %v706 = vunpack.c.l.b16 %v612
    %v707 = vunpack.c.h.b16 %v612
    %v708 = vunpack.c.l.b16 %v613
    %v709 = vunpack.c.h.b16 %v613
    %v710 = vunpack.c.l.b16 %v614
    %v711 = vunpack.c.h.b16 %v614
    %v712 = vunpack.c.l.b16 %v615
    %v713 = vunpack.c.h.b16 %v615
    %v714 = vunpack.c.l.b16 %v616
    %v715 = vunpack.c.h.b16 %v616
    %v716 = vunpack.c.l.b16 %v617
    %v717 = vunpack.c.h.b16 %v617
    %v718 = vunpack.c.l.b16 %v618
    %v719 = vunpack.c.h.b16 %v618
    %v720 = vunpack.c.l.b16 %v619
    %v721 = vunpack.c.h.b16 %v619
    %v722 = vpack.c.b16 %v660, %v658
    %v723 = vpack.c.b16 %v661, %v659
    %v724 = vpack.c.b16 %v664, %v662
    %v725 = vpack.c.b16 %v665, %v663
    %v726 = vpack.c.b16 %v668, %v666
    %v727 = vpack.c.b16 %v669, %v667
    %v728 = vpack.c.b16 %v672, %v670
    %v729 = vpack.c.b16 %v673, %v671
    %v730 = vpack.c.b16 %v676, %v674
    %v731 = vpack.c.b16 %v677, %v675
    %v732 = vpack.c.b16 %v680, %v678
    %v733 = vpack.c.b16 %v681, %v679
    %v734 = vpack.c.b16 %v684, %v682
    %v735 = vpack.c.b16 %v685, %v683
    %v736 = vpack.c.b16 %v688, %v686
    %v737 = vpack.c.b16 %v689, %v687
    %v738 = vpack.c.b16 %v692, %v690
    %v739 = vpack.c.b16 %v693, %v691
    %v740 = vpack.c.b16 %v696, %v694
    %v741 = vpack.c.b16 %v697, %v695
    %v742 = vpack.c.b16 %v700, %v698
    %v743 = vpack.c.b16 %v701, %v699
    %v744 = vpack.c.b16 %v704, %v702
    %v745 = vpack.c.b16 %v705, %v703
    %v746 = vpack.c.b16 %v708, %v706
    %v747 = vpack.c.b16 %v709, %v707
    %v748 = vpack.c.b16 %v712, %v710
    %v749 = vpack.c.b16 %v713, %v711
    %v750 = vpack.c.b16 %v716, %v714
    %v751 = vpack.c.b16 %v717, %v715
    %v752 = vpack.c.b16 %v720, %v718
    %v753 = vpack.c.b16 %v721, %v719
    %786 = vmatpush.bf16.msra.mxu0 %v736
    %787 = vmatpush.bf16.msra.mxu0 %v734
    %788 = vmatpush.bf16.msra.mxu0 %v732
    %789 = vmatpush.bf16.msra.mxu0 %v730
    %790 = vmatpush.bf16.msra.mxu0 %v728
    %791 = vmatpush.bf16.msra.mxu0 %v726
    %792 = vmatpush.bf16.msra.mxu0 %v724
    %793 = vmatpush.bf16.msra.mxu0 %v722
    %794 = vmatmul.bf16.gmra.mxu0 %v580
    %v795 = vpop.f32.mrf.mxu0
    %v796 = vadd.f32 %v622, %v795
    %v797 = vpop.f32.mrf.mxu0
    %v798 = vadd.f32 %v622, %v797
    %799 = vmatmul.bf16.gmra.mxu0 %v582
    %v800 = vpop.f32.mrf.mxu0
    %v801 = vadd.f32 %v622, %v800
    %v802 = vpop.f32.mrf.mxu0
    %v803 = vadd.f32 %v622, %v802
    %804 = vmatmul.bf16.gmra.mxu0 %v584
    %v805 = vpop.f32.mrf.mxu0
    %v806 = vadd.f32 %v622, %v805
    %v807 = vpop.f32.mrf.mxu0
    %v808 = vadd.f32 %v622, %v807
    %809 = vmatmul.bf16.gmra.mxu0 %v586
    %v810 = vpop.f32.mrf.mxu0
    %v811 = vadd.f32 %v622, %v810
    %v812 = vpop.f32.mrf.mxu0
    %813 = vdwg.mxu0
    %814 = vmatpush.bf16.msra.mxu0 %v752
    %815 = vmatpush.bf16.msra.mxu0 %v750
    %816 = vmatpush.bf16.msra.mxu0 %v748
    %817 = vmatpush.bf16.msra.mxu0 %v746
    %818 = vmatpush.bf16.msra.mxu0 %v744
    %819 = vmatpush.bf16.msra.mxu0 %v742
    %820 = vmatpush.bf16.msra.mxu0 %v740
    %821 = vmatpush.bf16.msra.mxu0 %v738
    %822 = vmatmul.bf16.gmra.mxu0 %v581
    %v823 = vpop.f32.mrf.mxu0
    %v824 = vadd.f32 %v796, %v823
    %v825 = vpop.f32.mrf.mxu0
    %v826 = vadd.f32 %v798, %v825
    %827 = vmatmul.bf16.gmra.mxu0 %v583
    %v828 = vpop.f32.mrf.mxu0
    %v829 = vadd.f32 %v801, %v828
    %v830 = vpop.f32.mrf.mxu0
    %v831 = vadd.f32 %v803, %v830
    %832 = vmatmul.bf16.gmra.mxu0 %v585
    %v833 = vpop.f32.mrf.mxu0
    %v834 = vadd.f32 %v806, %v833
    %v835 = vpop.f32.mrf.mxu0
    %v836 = vadd.f32 %v808, %v835
    %837 = vmatmul.bf16.gmra.mxu0 %v587
    %v838 = vpop.f32.mrf.mxu0
    %v839 = vadd.f32 %v811, %v838
    %v840 = vpop.f32.mrf.mxu0
    %841 = vdwg.mxu0
    %842 = vmatpush.bf16.msra.mxu0 %v737
    %843 = vmatpush.bf16.msra.mxu0 %v735
    %844 = vmatpush.bf16.msra.mxu0 %v733
    %845 = vmatpush.bf16.msra.mxu0 %v731
    %846 = vmatpush.bf16.msra.mxu0 %v729
    %847 = vmatpush.bf16.msra.mxu0 %v727
    %848 = vmatpush.bf16.msra.mxu0 %v725
    %849 = vmatpush.bf16.msra.mxu0 %v723
    %850 = vmatmul.bf16.gmra.mxu0 %v580
    %v851 = vpop.f32.mrf.mxu0
    %v852 = vadd.f32 %v623, %v851
    %v853 = vpop.f32.mrf.mxu0
    %v854 = vadd.f32 %v623, %v853
    %855 = vmatmul.bf16.gmra.mxu0 %v582
    %v856 = vpop.f32.mrf.mxu0
    %v857 = vadd.f32 %v623, %v856
    %v858 = vpop.f32.mrf.mxu0
    %v859 = vadd.f32 %v623, %v858
    %860 = vmatmul.bf16.gmra.mxu0 %v584
    %v861 = vpop.f32.mrf.mxu0
    %v862 = vadd.f32 %v623, %v861
    %v863 = vpop.f32.mrf.mxu0
    %v864 = vadd.f32 %v623, %v863
    %865 = vmatmul.bf16.gmra.mxu0 %v586
    %v866 = vpop.f32.mrf.mxu0
    %v867 = vadd.f32 %v623, %v866
    %v868 = vpop.f32.mrf.mxu0
    %869 = vdwg.mxu0
    %870 = vmatpush.bf16.msra.mxu0 %v753
    %871 = vmatpush.bf16.msra.mxu0 %v751
    %872 = vmatpush.bf16.msra.mxu0 %v749
    %873 = vmatpush.bf16.msra.mxu0 %v747
    %874 = vmatpush.bf16.msra.mxu0 %v745
    %875 = vmatpush.bf16.msra.mxu0 %v743
    %876 = vmatpush.bf16.msra.mxu0 %v741
    %877 = vmatpush.bf16.msra.mxu0 %v739
    %878 = vmatmul.bf16.gmra.mxu0 %v581
    %v879 = vpop.f32.mrf.mxu0
    %v880 = vadd.f32 %v852, %v879
    %v881 = vpop.f32.mrf.mxu0
    %v882 = vadd.f32 %v854, %v881
    %883 = vmatmul.bf16.gmra.mxu0 %v583
    %v884 = vpop.f32.mrf.mxu0
    %v885 = vadd.f32 %v857, %v884
    %v886 = vpop.f32.mrf.mxu0
    %v887 = vadd.f32 %v859, %v886
    %888 = vmatmul.bf16.gmra.mxu0 %v585
    %v889 = vpop.f32.mrf.mxu0
    %v890 = vadd.f32 %v862, %v889
    %v891 = vpop.f32.mrf.mxu0
    %v892 = vadd.f32 %v864, %v891
    %893 = vmatmul.bf16.gmra.mxu0 %v587
    %v894 = vpop.f32.mrf.mxu0
    %v895 = vadd.f32 %v867, %v894
    %v896 = vpop.f32.mrf.mxu0
    %897 = vdwg.mxu0
    %vm898 = vcmp.ge.f32.partialorder %v824, 0.0
    %vm899 = vcmp.ge.f32.partialorder %v880, 0.0
    %vm900 = vcmp.ge.f32.partialorder %v826, 0.0
    %vm901 = vcmp.ge.f32.partialorder %v882, 0.0
    %vm902 = vcmp.ge.f32.partialorder %v829, 0.0
    %vm903 = vcmp.ge.f32.partialorder %v885, 0.0
    %vm904 = vcmp.ge.f32.partialorder %v831, 0.0
    %vm905 = vcmp.ge.f32.partialorder %v887, 0.0
    %vm906 = vcmp.ge.f32.partialorder %v834, 0.0
    %vm907 = vcmp.ge.f32.partialorder %v890, 0.0
    %vm908 = vcmp.ge.f32.partialorder %v836, 0.0
    %vm909 = vcmp.ge.f32.partialorder %v892, 0.0
    %vm910 = vcmp.ge.f32.partialorder %v839, 0.0
    %vm911 = vcmp.ge.f32.partialorder %v895, 0.0
    %v912 = vmul.f32 %v824, 0.22916667
    %v913 = vmul.f32 %v880, 0.22916667
    %v914 = vmul.f32 %v826, 0.22916667
    %v915 = vmul.f32 %v882, 0.22916667
    %v916 = vmul.f32 %v829, 0.22916667
    %v917 = vmul.f32 %v885, 0.22916667
    %v918 = vmul.f32 %v831, 0.22916667
    %v919 = vmul.f32 %v887, 0.22916667
    %v920 = vmul.f32 %v834, 0.22916667
    %v921 = vmul.f32 %v890, 0.22916667
    %v922 = vmul.f32 %v836, 0.22916667
    %v923 = vmul.f32 %v892, 0.22916667
    %v924 = vmul.f32 %v839, 0.22916667
    %v925 = vmul.f32 %v895, 0.22916667
    %v926 = vsel %vm898, %v824, %v912
    %v927 = vsel %vm899, %v880, %v913
    %v928 = vsel %vm900, %v826, %v914
    %v929 = vsel %vm901, %v882, %v915
    %v930 = vsel %vm902, %v829, %v916
    %v931 = vsel %vm903, %v885, %v917
    %v932 = vsel %vm904, %v831, %v918
    %v933 = vsel %vm905, %v887, %v919
    %v934 = vsel %vm906, %v834, %v920
    %v935 = vsel %vm907, %v890, %v921
    %v936 = vsel %vm908, %v836, %v922
    %v937 = vsel %vm909, %v892, %v923
    %v938 = vsel %vm910, %v839, %v924
    %v939 = vsel %vm911, %v895, %v925
    %v940 = vpack.c.bf16 %v928, %v926
    %v941 = vpack.c.bf16 %v929, %v927
    %v942 = vpack.c.bf16 %v932, %v930
    %v943 = vpack.c.bf16 %v933, %v931
    %v944 = vpack.c.bf16 %v936, %v934
    %v945 = vpack.c.bf16 %v937, %v935
    %v946 = vpack.c.bf16 %v938, %v938
    %v947 = vpack.c.bf16 %v939, %v939
    %v948 = vld [vmem:[#allocation10] sm:$0xf]
    %v949 = vld [vmem:[#allocation10 + $0x4] sm:$0xf]
    %v950 = vld [vmem:[#allocation10 + $0x8] sm:$0xf]
    %v951 = vld [vmem:[#allocation10 + $0xc] sm:$0xf]
    %v952 = vld [vmem:[#allocation10 + $0x10] sm:$0xf]
    %v953 = vld [vmem:[#allocation10 + $0x14] sm:$0xf]
    %v954 = vld [vmem:[#allocation10 + $0x18] sm:$0xf]
    %v955 = vld [vmem:[#allocation10 + $0x1c] sm:$0xf]
    %v956 = vld [vmem:[#allocation10 + $0x20] sm:$0xf]
    %v957 = vld [vmem:[#allocation10 + $0x24] sm:$0xf]
    %v958 = vld [vmem:[#allocation10 + $0x28] sm:$0xf]
    %v959 = vld [vmem:[#allocation10 + $0x2c] sm:$0xf]
    %v960 = vld [vmem:[#allocation10 + $0x30] sm:$0xf]
    %v961 = vld [vmem:[#allocation10 + $0x34] sm:$0xf]
    %v962 = vld [vmem:[#allocation10 + $0x38] sm:$0xf]
    %v963 = vld [vmem:[#allocation10 + $0x3c] sm:$0xf]
    %v964 = vld [vmem:[#allocation10 + $0x40] sm:$0xf]
    %v965 = vld [vmem:[#allocation10 + $0x44] sm:$0xf]
    %v966 = vld [vmem:[#allocation10 + $0x48] sm:$0xf]
    %v967 = vld [vmem:[#allocation10 + $0x4c] sm:$0xf]
    %v968 = vld [vmem:[#allocation10 + $0x50] sm:$0xf]
    %v969 = vld [vmem:[#allocation10 + $0x54] sm:$0xf]
    %v970 = vld [vmem:[#allocation10 + $0x58] sm:$0xf]
    %v971 = vld [vmem:[#allocation10 + $0x5c] sm:$0xf]
    %v972 = vld [vmem:[#allocation10 + $0x60] sm:$0xf]
    %v973 = vld [vmem:[#allocation10 + $0x64] sm:$0xf]
    %v974 = vld [vmem:[#allocation10 + $0x68] sm:$0xf]
    %v975 = vld [vmem:[#allocation10 + $0x6c] sm:$0xf]
    %v976 = vld [vmem:[#allocation10 + $0x70] sm:$0xf]
    %v977 = vld [vmem:[#allocation10 + $0x74] sm:$0xf]
    %v978 = vld [vmem:[#allocation10 + $0x78] sm:$0xf]
    %v979 = vld [vmem:[#allocation10 + $0x7c] sm:$0xf]
    %v980 = vld [vmem:[%s8] sm:$0x1]
    %v982 = vperm.slane %v980, 0
    %v1016 = vunpack.c.l.b16 %v948
    %v1017 = vunpack.c.l.b16 %v949
    %v1018 = vunpack.c.l.b16 %v950
    %v1019 = vunpack.c.l.b16 %v951
    %v1020 = vunpack.c.l.b16 %v952
    %v1021 = vunpack.c.l.b16 %v953
    %v1022 = vunpack.c.l.b16 %v954
    %v1023 = vunpack.c.l.b16 %v955
    %v1024 = vunpack.c.l.b16 %v956
    %v1025 = vunpack.c.l.b16 %v957
    %v1026 = vunpack.c.l.b16 %v958
    %v1027 = vunpack.c.l.b16 %v959
    %v1028 = vunpack.c.l.b16 %v960
    %v1029 = vunpack.c.l.b16 %v961
    %v1030 = vunpack.c.l.b16 %v962
    %v1031 = vunpack.c.l.b16 %v963
    %v1032 = vunpack.c.l.b16 %v964
    %v1033 = vunpack.c.l.b16 %v965
    %v1034 = vunpack.c.l.b16 %v966
    %v1035 = vunpack.c.l.b16 %v967
    %v1036 = vunpack.c.l.b16 %v968
    %v1037 = vunpack.c.l.b16 %v969
    %v1038 = vunpack.c.l.b16 %v970
    %v1039 = vunpack.c.l.b16 %v971
    %v1040 = vunpack.c.l.b16 %v972
    %v1041 = vunpack.c.l.b16 %v973
    %v1042 = vunpack.c.l.b16 %v974
    %v1043 = vunpack.c.l.b16 %v975
    %v1044 = vunpack.c.l.b16 %v976
    %v1045 = vunpack.c.l.b16 %v977
    %v1046 = vunpack.c.l.b16 %v978
    %v1047 = vunpack.c.l.b16 %v979
    %v1048 = vpack.c.b16 %v1017, %v1016
    %v1049 = vpack.c.b16 %v1019, %v1018
    %v1050 = vpack.c.b16 %v1021, %v1020
    %v1051 = vpack.c.b16 %v1023, %v1022
    %v1052 = vpack.c.b16 %v1025, %v1024
    %v1053 = vpack.c.b16 %v1027, %v1026
    %v1054 = vpack.c.b16 %v1029, %v1028
    %v1055 = vpack.c.b16 %v1031, %v1030
    %v1056 = vpack.c.b16 %v1033, %v1032
    %v1057 = vpack.c.b16 %v1035, %v1034
    %v1058 = vpack.c.b16 %v1037, %v1036
    %v1059 = vpack.c.b16 %v1039, %v1038
    %v1060 = vpack.c.b16 %v1041, %v1040
    %v1061 = vpack.c.b16 %v1043, %v1042
    %v1062 = vpack.c.b16 %v1045, %v1044
    %v1063 = vpack.c.b16 %v1047, %v1046
    %1080 = vmatpush.bf16.msra.mxu0 %v1055
    %1081 = vmatpush.bf16.msra.mxu0 %v1054
    %1082 = vmatpush.bf16.msra.mxu0 %v1053
    %1083 = vmatpush.bf16.msra.mxu0 %v1052
    %1084 = vmatpush.bf16.msra.mxu0 %v1051
    %1085 = vmatpush.bf16.msra.mxu0 %v1050
    %1086 = vmatpush.bf16.msra.mxu0 %v1049
    %1087 = vmatpush.bf16.msra.mxu0 %v1048
    %1088 = vmatmul.bf16.gmra.mxu0 %v940
    %v1089 = vpop.f32.mrf.mxu0
    %v1090 = vadd.f32 %v982, %v1089
    %v1091 = vpop.f32.mrf.mxu0
    %v1092 = vadd.f32 %v982, %v1091
    %1093 = vmatmul.bf16.gmra.mxu0 %v942
    %v1094 = vpop.f32.mrf.mxu0
    %v1095 = vadd.f32 %v982, %v1094
    %v1096 = vpop.f32.mrf.mxu0
    %v1097 = vadd.f32 %v982, %v1096
    %1098 = vmatmul.bf16.gmra.mxu0 %v944
    %v1099 = vpop.f32.mrf.mxu0
    %v1100 = vadd.f32 %v982, %v1099
    %v1101 = vpop.f32.mrf.mxu0
    %v1102 = vadd.f32 %v982, %v1101
    %1103 = vmatmul.bf16.gmra.mxu0 %v946
    %v1104 = vpop.f32.mrf.mxu0
    %v1105 = vadd.f32 %v982, %v1104
    %v1106 = vpop.f32.mrf.mxu0
    %1107 = vdwg.mxu0
    %1108 = vmatpush.bf16.msra.mxu0 %v1063
    %1109 = vmatpush.bf16.msra.mxu0 %v1062
    %1110 = vmatpush.bf16.msra.mxu0 %v1061
    %1111 = vmatpush.bf16.msra.mxu0 %v1060
    %1112 = vmatpush.bf16.msra.mxu0 %v1059
    %1113 = vmatpush.bf16.msra.mxu0 %v1058
    %1114 = vmatpush.bf16.msra.mxu0 %v1057
    %1115 = vmatpush.bf16.msra.mxu0 %v1056
    %1116 = vmatmul.bf16.gmra.mxu0 %v941
    %v1117 = vpop.f32.mrf.mxu0
    %v1118 = vadd.f32 %v1090, %v1117
    %v1119 = vpop.f32.mrf.mxu0
    %v1120 = vadd.f32 %v1092, %v1119
    %1121 = vmatmul.bf16.gmra.mxu0 %v943
    %v1122 = vpop.f32.mrf.mxu0
    %v1123 = vadd.f32 %v1095, %v1122
    %v1124 = vpop.f32.mrf.mxu0
    %v1125 = vadd.f32 %v1097, %v1124
    %1126 = vmatmul.bf16.gmra.mxu0 %v945
    %v1127 = vpop.f32.mrf.mxu0
    %v1128 = vadd.f32 %v1100, %v1127
    %v1129 = vpop.f32.mrf.mxu0
    %v1130 = vadd.f32 %v1102, %v1129
    %1131 = vmatmul.bf16.gmra.mxu0 %v947
    %v1132 = vpop.f32.mrf.mxu0
    %v1133 = vadd.f32 %v1105, %v1132
    %v1134 = vpop.f32.mrf.mxu0
    %1135 = vdwg.mxu0
    %vm1136 = vcmp.ge.f32.partialorder %v1118, 0.0
    %vm1137 = vcmp.ge.f32.partialorder %v1120, 0.0
    %vm1138 = vcmp.ge.f32.partialorder %v1123, 0.0
    %vm1139 = vcmp.ge.f32.partialorder %v1125, 0.0
    %vm1140 = vcmp.ge.f32.partialorder %v1128, 0.0
    %vm1141 = vcmp.ge.f32.partialorder %v1130, 0.0
    %vm1142 = vcmp.ge.f32.partialorder %v1133, 0.0
    %v1143 = vmul.f32 %v1118, 0.22916667
    %v1144 = vmul.f32 %v1120, 0.22916667
    %v1145 = vmul.f32 %v1123, 0.22916667
    %v1146 = vmul.f32 %v1125, 0.22916667
    %v1147 = vmul.f32 %v1128, 0.22916667
    %v1148 = vmul.f32 %v1130, 0.22916667
    %v1149 = vmul.f32 %v1133, 0.22916667
    %v1150 = vsel %vm1136, %v1118, %v1143
    %v1151 = vsel %vm1137, %v1120, %v1144
    %v1152 = vsel %vm1138, %v1123, %v1145
    %v1153 = vsel %vm1139, %v1125, %v1146
    %v1154 = vsel %vm1140, %v1128, %v1147
    %v1155 = vsel %vm1141, %v1130, %v1148
    %v1156 = vsel %vm1142, %v1133, %v1149
    %v1157 = vpack.c.bf16 %v1151, %v1150
    %v1158 = vpack.c.bf16 %v1153, %v1152
    %v1159 = vpack.c.bf16 %v1155, %v1154
    %v1160 = vpack.c.bf16 %v1156, %v1156
    %v1161 = vld [vmem:[#allocation12] sm:$0xf]
    %v1162 = vld [vmem:[#allocation12 + $0x4] sm:$0xf]
    %v1163 = vld [vmem:[#allocation12 + $0x8] sm:$0xf]
    %v1164 = vld [vmem:[#allocation12 + $0xc] sm:$0xf]
    %v1165 = vld [vmem:[#allocation12 + $0x10] sm:$0xf]
    %v1166 = vld [vmem:[#allocation12 + $0x14] sm:$0xf]
    %v1167 = vld [vmem:[#allocation12 + $0x18] sm:$0xf]
    %v1168 = vld [vmem:[#allocation12 + $0x1c] sm:$0xf]
    %v1169 = vld [vmem:[#allocation12 + $0x20] sm:$0xf]
    %v1170 = vld [vmem:[#allocation12 + $0x24] sm:$0xf]
    %v1171 = vld [vmem:[#allocation12 + $0x28] sm:$0xf]
    %v1172 = vld [vmem:[#allocation12 + $0x2c] sm:$0xf]
    %v1173 = vld [vmem:[#allocation12 + $0x30] sm:$0xf]
    %v1174 = vld [vmem:[#allocation12 + $0x34] sm:$0xf]
    %v1175 = vld [vmem:[#allocation12 + $0x38] sm:$0xf]
    %v1176 = vld [vmem:[#allocation12 + $0x3c] sm:$0xf]
    %v1177 = vld [vmem:[%s10] sm:$0x1]
    %v1179 = vperm.slane %v1177, 0
    %v1197 = vunpack.c.l.b16 %v1161
    %v1198 = vunpack.c.l.b16 %v1162
    %v1199 = vunpack.c.l.b16 %v1163
    %v1200 = vunpack.c.l.b16 %v1164
    %v1201 = vunpack.c.l.b16 %v1165
    %v1202 = vunpack.c.l.b16 %v1166
    %v1203 = vunpack.c.l.b16 %v1167
    %v1204 = vunpack.c.l.b16 %v1168
    %v1205 = vunpack.c.l.b16 %v1169
    %v1206 = vunpack.c.l.b16 %v1170
    %v1207 = vunpack.c.l.b16 %v1171
    %v1208 = vunpack.c.l.b16 %v1172
    %v1209 = vunpack.c.l.b16 %v1173
    %v1210 = vunpack.c.l.b16 %v1174
    %v1211 = vunpack.c.l.b16 %v1175
    %v1212 = vunpack.c.l.b16 %v1176
    %v1213 = vpack.c.b16 %v1198, %v1197
    %v1214 = vpack.c.b16 %v1200, %v1199
    %v1215 = vpack.c.b16 %v1202, %v1201
    %v1216 = vpack.c.b16 %v1204, %v1203
    %v1217 = vpack.c.b16 %v1206, %v1205
    %v1218 = vpack.c.b16 %v1208, %v1207
    %v1219 = vpack.c.b16 %v1210, %v1209
    %v1220 = vpack.c.b16 %v1212, %v1211
    %1229 = vmatpush.bf16.msra.mxu0 %v1220
    %1230 = vmatpush.bf16.msra.mxu0 %v1219
    %1231 = vmatpush.bf16.msra.mxu0 %v1218
    %1232 = vmatpush.bf16.msra.mxu0 %v1217
    %1233 = vmatpush.bf16.msra.mxu0 %v1216
    %1234 = vmatpush.bf16.msra.mxu0 %v1215
    %1235 = vmatpush.bf16.msra.mxu0 %v1214
    %1236 = vmatpush.bf16.msra.mxu0 %v1213
    %1237 = vmatmul.bf16.gmra.mxu0 %v1157
    %v1238 = vpop.f32.mrf.mxu0
    %v1239 = vadd.f32 %v1179, %v1238
    %v1240 = vpop.f32.mrf.mxu0
    %v1241 = vadd.f32 %v1179, %v1240
    %1242 = vmatmul.bf16.gmra.mxu0 %v1158
    %v1243 = vpop.f32.mrf.mxu0
    %v1244 = vadd.f32 %v1179, %v1243
    %v1245 = vpop.f32.mrf.mxu0
    %v1246 = vadd.f32 %v1179, %v1245
    %1247 = vmatmul.bf16.gmra.mxu0 %v1159
    %v1248 = vpop.f32.mrf.mxu0
    %v1249 = vadd.f32 %v1179, %v1248
    %v1250 = vpop.f32.mrf.mxu0
    %v1251 = vadd.f32 %v1179, %v1250
    %1252 = vmatmul.bf16.gmra.mxu0 %v1160
    %v1253 = vpop.f32.mrf.mxu0
    %v1254 = vadd.f32 %v1179, %v1253
    %v1255 = vpop.f32.mrf.mxu0
    %1256 = vdwg.mxu0
    %v1257 = vpack.c.bf16 %v1239, %v1239
    %v1258 = vpack.c.bf16 %v1241, %v1241
    %v1259 = vpack.c.bf16 %v1244, %v1244
    %v1260 = vpack.c.bf16 %v1246, %v1246
    %v1261 = vpack.c.bf16 %v1249, %v1249
    %v1262 = vpack.c.bf16 %v1251, %v1251
    %v1263 = vpack.c.bf16 %v1254, %v1254
    %1264 = vst [vmem:[%s11] sm:$0xf] %v1257
    %1265 = vst [vmem:[%s11 + $0x4] sm:$0xf] %v1258
    %1266 = vst [vmem:[%s11 + $0x8] sm:$0xf] %v1259
    %1267 = vst [vmem:[%s11 + $0xc] sm:$0xf] %v1260
    %1268 = vst [vmem:[%s11 + $0x10] sm:$0xf] %v1261
    %1269 = vst [vmem:[%s11 + $0x14] sm:$0xf] %v1262
    %1270 = vst [vmem:[%s11 + $0x18] sm:$0x1] %v1263
    // Predicated region
    $region74: #{net_tune_forward.1} parent=1 // pred_check
      _
    $region75: #{net_tune_forward.1} parent=1 // pred_check_branch
      %1272 = sbr.rel (0) target = $region77
    $region76: #{net_tune_forward.1} parent=1 // pred_region
      _
    $region77: #{net_tune_forward.1} parent=1 // pred_fallthru
      _
    // Predicated region
    $region78: #{net_tune_forward.1} parent=1 // pred_check
      _
    $region79: #{net_tune_forward.1} parent=1 // pred_check_branch
      %1274 = sbr.rel (0) target = $region81
    $region80: #{net_tune_forward.1} parent=1 // pred_region
      _
    $region81: #{net_tune_forward.1} parent=1 // pred_fallthru
      _
    %1275 = vsyncpa [#allocation3], 1
    %1276 = vsyncpa [#allocation5], 1
    %1277 = vsyncpa [#allocation8], 1
    %1278 = vsyncpa [#allocation11], 1

</llo_original>
